<compile_context>
chip_gen: v7x
topology: tpu7x:2x2x1
jax: 0.10.0
libtpu: 0.0.40
codegen_flags: <defaults>
</compile_context>

<pallas_src>
import math
from functools import partial

import jax
import jax.numpy as jnp
from jax.experimental import pallas as pl
from jax.experimental.pallas import tpu as pltpu


# --------------------------------- kernel ------------------------------------

def ntn_kernel(hi_ref, hj_ref, w3_ref, rep_ref, sel_ref, vit_ref, vjt_ref,
               b3_ref, out_ref):
    hi = hi_ref[...]                                   # (bt, D)   bf16
    hj = hj_ref[...]                                   # (bt, D)   bf16

    # u[b, k*D+j] = sum_i hi[b, i] * W3[k, i, j]
    u = jnp.dot(hi, w3_ref[...], preferred_element_type=jnp.float32)       # (bt, K*D)
    # hj_rep[b, k*D+j] = hj[b, j]  (lane replication done on the MXU -> exact)
    hj_rep = jnp.dot(hj, rep_ref[...], preferred_element_type=jnp.float32)  # (bt, K*D)
    # term1[b, k] = sum_j u[b, k*D+j] * hj[b, j]   (segmented sum via 0/1 SEL)
    term1 = jnp.dot(u * hj_rep, sel_ref[...], preferred_element_type=jnp.float32)
    # term2[b, k] = V[k, :D] . hi[b] + V[k, D:] . hj[b]
    term2 = (jnp.dot(hi, vit_ref[...], preferred_element_type=jnp.float32) +
             jnp.dot(hj, vjt_ref[...], preferred_element_type=jnp.float32))

    out_ref[...] = jnp.maximum(term1 + term2 + b3_ref[...], 0.0)           # (bt, K)


# --------------------------- parameter preparation ---------------------------

def prepare_ntn_params(W3, V, b3, *, compute_dtype=jnp.bfloat16):
    """One-time repack of module parameters into kernel-ready arrays.

    Do this at init time, NOT per forward call (the per-call concat/transpose
    of the previous version was pure waste for static weights).
    """
    K, D, _ = W3.shape
    w3_2d = jnp.transpose(W3, (1, 0, 2)).reshape(D, K * D).astype(compute_dtype)
    rep = jnp.tile(jnp.eye(D, dtype=compute_dtype), (1, K))          # (D, K*D)
    sel = jnp.repeat(jnp.eye(K, dtype=jnp.float32), D, axis=0)       # (K*D, K)
    vit = V[:, :D].T.astype(compute_dtype)                           # (D, K)
    vjt = V[:, D:].T.astype(compute_dtype)                           # (D, K)
    return dict(w3=w3_2d, rep=rep, sel=sel, vit=vit, vjt=vjt,
                b3=b3.astype(jnp.float32))


# -------------------------------- forward pass --------------------------------

@partial(jax.jit, static_argnames=("block_b",))
def tensor_network_forward_batched(hi, hj, params, *, block_b=512):
    """hi, hj: (B, D) batched graph-pair embeddings. Returns (B, K) f32 scores."""
    B, D = hi.shape
    K = params["b3"].shape[1]
    cdt = params["w3"].dtype

    # Block size: one large step when B fits (best on single-TC v5e/v6e).  On
    # v7x pass block_b ~= ceil(B/2) rounded to 16 so the "parallel" grid axis
    # gives each TensorCore a step.
    if B <= block_b:
        bt = max(16, ((B + 15) // 16) * 16)
    else:
        assert block_b % 16 == 0, "block_b must be a multiple of 16"
        bt = block_b
    padded_b = ((B + bt - 1) // bt) * bt
    n_steps = padded_b // bt

    def pad(x):
        x = x.astype(cdt)
        if padded_b == B:
            return x
        return jnp.pad(x, ((0, padded_b - B), (0, 0)))

    hi_q, hj_q = pad(hi), pad(hj)

    act_spec = pl.BlockSpec((bt, D), lambda i: (i, 0))

    def resident(shape):
        return pl.BlockSpec(shape, lambda i: tuple(0 for _ in shape))

    out = pl.pallas_call(
        ntn_kernel,
        out_shape=jax.ShapeDtypeStruct((padded_b, K), jnp.float32),
        grid=(n_steps,),
        in_specs=[
            act_spec,                                   # hi tile  (bt, D)
            act_spec,                                   # hj tile  (bt, D)
            resident(params["w3"].shape),               # (D, K*D)  resident weights
            resident(params["rep"].shape),              # (D, K*D)
            resident(params["sel"].shape),              # (K*D, K)
            resident(params["vit"].shape),              # (D, K)
            resident(params["vjt"].shape),              # (D, K)
            resident(params["b3"].shape),               # (1, K)
        ],
        out_specs=pl.BlockSpec((bt, K), lambda i: (i, 0)),
        compiler_params=pltpu.CompilerParams(
            dimension_semantics=("parallel",)),         # megacore sharding on v7x
    )(hi_q, hj_q, params["w3"], params["rep"], params["sel"],
      params["vit"], params["vjt"], params["b3"])

    return out[:B]


def tensor_network_forward(hi, hj, params):
    """Matches the PyTorch module signature: hi, hj are (1, D). Returns (1, K)."""
    return tensor_network_forward_batched(hi, hj, params)


# ------------------- parameter init & pure-JAX references --------------------

def xavier_uniform(key, shape, fan_in, fan_out, dtype=jnp.float32):
    bound = math.sqrt(6.0 / (fan_in + fan_out))
    return jax.random.uniform(key, shape, dtype=dtype, minval=-bound, maxval=bound)


def reference_forward(hi, hj, W3, V, b3):
    """Pure-JAX mirror of the PyTorch code (single pair, f32)."""
    term1 = jnp.concatenate(
        [hi @ W3[k] @ hj.T for k in range(W3.shape[0])], axis=1)        # (1, K)
    term2 = (V @ jnp.concatenate([hi, hj], axis=1).T).T                 # (1, K)
    return jnp.maximum(term1 + term2 + b3, 0.0)


def reference_forward_batched(hi, hj, W3, V, b3):
    hp = jax.lax.Precision.HIGHEST
    term1 = jnp.einsum("bi,kij,bj->bk", hi, W3, hj, precision=hp)       # (B, K)
    term2 = jnp.einsum("kn,bn->bk", V,
                       jnp.concatenate([hi, hj], axis=1), precision=hp) # (B, K)
    return jnp.maximum(term1 + term2 + b3, 0.0)


if __name__ == "__main__":
    D = 32   # config['filters'][-1]
    K = 16   # config['tensor_neurons']

    key = jax.random.PRNGKey(0)
    k_w3, k_v, k_b3, k_hi, k_hj, k_bhi, k_bhj = jax.random.split(key, 7)

    # PyTorch xavier_uniform_ fan computation:
    #   W3 (K, D, D): fan_in = D*D, fan_out = K*D
    #   V  (K, 2D)  : fan_in = 2D,  fan_out = K
    #   b3 (1, K)   : fan_in = K,   fan_out = 1
    W3 = xavier_uniform(k_w3, (K, D, D), fan_in=D * D, fan_out=K * D)
    V = xavier_uniform(k_v, (K, 2 * D), fan_in=2 * D, fan_out=K)
    b3 = xavier_uniform(k_b3, (1, K), fan_in=K, fan_out=1)

    params = prepare_ntn_params(W3, V, b3)           # one-time repack (bf16 weights)

    # bf16-quantized mirror of what the kernel actually computes (bias stays f32)
    q = lambda x: x.astype(jnp.bfloat16).astype(jnp.float32)

    # ---- single-pair path (matches the PyTorch module signature) ----
    hi = jax.random.normal(k_hi, (1, D), dtype=jnp.float32)
    hj = jax.random.normal(k_hj, (1, D), dtype=jnp.float32)

    scores = tensor_network_forward(hi, hj, params)
    jax.block_until_ready(scores)
    assert scores.shape == (1, K), scores.shape
    ref_q = reference_forward(q(hi), q(hj), q(W3), q(V), b3)
    assert jnp.allclose(scores, ref_q, atol=1e-3, rtol=1e-3), (
        float(jnp.max(jnp.abs(scores - ref_q))))
    ref_f32 = reference_forward(hi, hj, W3, V, b3)          # bf16-level sanity check
    assert jnp.allclose(scores, ref_f32, atol=1e-1, rtol=1e-1), (
        float(jnp.max(jnp.abs(scores - ref_f32))))

    # ---- batched path: single big grid step (default), B not a multiple of bt ----
    B = 200
    hib = jax.random.normal(k_bhi, (B, D), dtype=jnp.float32)
    hjb = jax.random.normal(k_bhj, (B, D), dtype=jnp.float32)

    scores_b = tensor_network_forward_batched(hib, hjb, params)
    jax.block_until_ready(scores_b)
    assert scores_b.shape == (B, K), scores_b.shape
    ref_bq = reference_forward_batched(q(hib), q(hjb), q(W3), q(V), b3)
    assert jnp.allclose(scores_b, ref_bq, atol=1e-3, rtol=1e-3), (
        float(jnp.max(jnp.abs(scores_b - ref_bq))))
    ref_bf = reference_forward_batched(hib, hjb, W3, V, b3)
    assert jnp.allclose(scores_b, ref_bf, atol=1e-1, rtol=1e-1), (
        float(jnp.max(jnp.abs(scores_b - ref_bf))))

    # ---- batched path: multi-step grid (exercises tiling / padding path) ----
    scores_t = tensor_network_forward_batched(hib, hjb, params, block_b=64)
    jax.block_until_ready(scores_t)
    assert scores_t.shape == (B, K), scores_t.shape
    assert jnp.allclose(scores_t, ref_bq, atol=1e-3, rtol=1e-3), (
        float(jnp.max(jnp.abs(scores_t - ref_bq))))

    print("KERNEL_OK")
</pallas_src>

<mosaic_0001>
module attributes {stable_mosaic.version = 11 : i64} {
  func.func @ntn_kernel(%arg0: i32, %arg1: memref<16x32xbf16, #tpu.memory_space<vmem>>, %arg2: memref<16x32xbf16, #tpu.memory_space<vmem>>, %arg3: memref<32x512xbf16, #tpu.memory_space<vmem>>, %arg4: memref<32x512xbf16, #tpu.memory_space<vmem>>, %arg5: memref<512x16xf32, #tpu.memory_space<vmem>>, %arg6: memref<32x16xbf16, #tpu.memory_space<vmem>>, %arg7: memref<32x16xbf16, #tpu.memory_space<vmem>>, %arg8: memref<1x16xf32, #tpu.memory_space<vmem>>, %arg9: memref<16x16xf32, #tpu.memory_space<vmem>>) attributes {dimension_semantics = [#tpu.dimension_semantics<parallel>], iteration_bounds = array<i64: 1>, scalar_prefetch = 0 : i64, scratch_operands = 0 : i64, tpu.core_type = #tpu.core_type<tc>, window_params = [{transform_indices = @transform_0, window_bounds = array<i64: 16, 32>}, {transform_indices = @transform_1, window_bounds = array<i64: 16, 32>}, {pipeline_mode = #tpu.pipeline_mode<synchronous>, transform_indices = @transform_2, window_bounds = array<i64: 32, 512>}, {pipeline_mode = #tpu.pipeline_mode<synchronous>, transform_indices = @transform_3, window_bounds = array<i64: 32, 512>}, {pipeline_mode = #tpu.pipeline_mode<synchronous>, transform_indices = @transform_4, window_bounds = array<i64: 512, 16>}, {pipeline_mode = #tpu.pipeline_mode<synchronous>, transform_indices = @transform_5, window_bounds = array<i64: 32, 16>}, {pipeline_mode = #tpu.pipeline_mode<synchronous>, transform_indices = @transform_6, window_bounds = array<i64: 32, 16>}, {pipeline_mode = #tpu.pipeline_mode<synchronous>, transform_indices = @transform_7, window_bounds = array<i64: 1, 16>}, {transform_indices = @transform_8, window_bounds = array<i64: 16, 16>}]} {
    %c0 = arith.constant 0 : index
    %c0_0 = arith.constant 0 : index
    %0 = vector.load %arg1[%c0, %c0_0] : memref<16x32xbf16, #tpu.memory_space<vmem>>, vector<16x32xbf16>
    %c0_1 = arith.constant 0 : index
    %c0_2 = arith.constant 0 : index
    %1 = vector.load %arg2[%c0_1, %c0_2] : memref<16x32xbf16, #tpu.memory_space<vmem>>, vector<16x32xbf16>
    %c0_3 = arith.constant 0 : index
    %c0_4 = arith.constant 0 : index
    %2 = vector.load %arg3[%c0_3, %c0_4] : memref<32x512xbf16, #tpu.memory_space<vmem>>, vector<32x512xbf16>
    %cst = arith.constant dense<0.000000e+00> : vector<16x512xf32>
    %3 = tpu.matmul %0, %2, %cst {dimension_numbers = #tpu.dot_dimension_numbers<[1], [0], [0], [1], [0, 0, 1, 1], [], []>} : vector<16x32xbf16>, vector<32x512xbf16>, vector<16x512xf32> -> vector<16x512xf32>
    %c0_5 = arith.constant 0 : index
    %c0_6 = arith.constant 0 : index
    %4 = vector.load %arg4[%c0_5, %c0_6] : memref<32x512xbf16, #tpu.memory_space<vmem>>, vector<32x512xbf16>
    %cst_7 = arith.constant dense<0.000000e+00> : vector<16x512xf32>
    %5 = tpu.matmul %1, %4, %cst_7 {dimension_numbers = #tpu.dot_dimension_numbers<[1], [0], [0], [1], [0, 0, 1, 1], [], []>} : vector<16x32xbf16>, vector<32x512xbf16>, vector<16x512xf32> -> vector<16x512xf32>
    %6 = arith.mulf %3, %5 : vector<16x512xf32>
    %c0_8 = arith.constant 0 : index
    %c0_9 = arith.constant 0 : index
    %7 = vector.load %arg5[%c0_8, %c0_9] : memref<512x16xf32, #tpu.memory_space<vmem>>, vector<512x16xf32>
    %cst_10 = arith.constant dense<0.000000e+00> : vector<16x16xf32>
    %8 = tpu.matmul %6, %7, %cst_10 {dimension_numbers = #tpu.dot_dimension_numbers<[1], [0], [0], [1], [0, 0, 1, 1], [], []>} : vector<16x512xf32>, vector<512x16xf32>, vector<16x16xf32> -> vector<16x16xf32>
    %c0_11 = arith.constant 0 : index
    %c0_12 = arith.constant 0 : index
    %9 = vector.load %arg6[%c0_11, %c0_12] : memref<32x16xbf16, #tpu.memory_space<vmem>>, vector<32x16xbf16>
    %cst_13 = arith.constant dense<0.000000e+00> : vector<16x16xf32>
    %10 = tpu.matmul %0, %9, %cst_13 {dimension_numbers = #tpu.dot_dimension_numbers<[1], [0], [0], [1], [0, 0, 1, 1], [], []>} : vector<16x32xbf16>, vector<32x16xbf16>, vector<16x16xf32> -> vector<16x16xf32>
    %c0_14 = arith.constant 0 : index
    %c0_15 = arith.constant 0 : index
    %11 = vector.load %arg7[%c0_14, %c0_15] : memref<32x16xbf16, #tpu.memory_space<vmem>>, vector<32x16xbf16>
    %cst_16 = arith.constant dense<0.000000e+00> : vector<16x16xf32>
    %12 = tpu.matmul %1, %11, %cst_16 {dimension_numbers = #tpu.dot_dimension_numbers<[1], [0], [0], [1], [0, 0, 1, 1], [], []>} : vector<16x32xbf16>, vector<32x16xbf16>, vector<16x16xf32> -> vector<16x16xf32>
    %13 = arith.addf %10, %12 : vector<16x16xf32>
    %14 = arith.addf %8, %13 : vector<16x16xf32>
    %c0_17 = arith.constant 0 : index
    %c0_18 = arith.constant 0 : index
    %15 = vector.load %arg8[%c0_17, %c0_18] : memref<1x16xf32, #tpu.memory_space<vmem>>, vector<1x16xf32>
    %16 = vector.broadcast %15 : vector<1x16xf32> to vector<16x16xf32>
    %17 = arith.addf %14, %16 : vector<16x16xf32>
    %cst_19 = arith.constant 0.000000e+00 : f32
    %18 = vector.broadcast %cst_19 : f32 to vector<16x16xf32>
    %19 = arith.maximumf %17, %18 : vector<16x16xf32>
    %c0_20 = arith.constant 0 : index
    %c0_21 = arith.constant 0 : index
    %20 = vector.load %arg9[%c0_20, %c0_21] : memref<16x16xf32, #tpu.memory_space<vmem>>, vector<16x16xf32>
    tpu.vector_store %arg9[%c0_20, %c0_21], %19 {strides = array<i32>} : memref<16x16xf32, #tpu.memory_space<vmem>>, vector<16x16xf32>,
    return
  }
  func.func @transform_0(%arg0: i32) -> (i32, i32) {
    %c0_i32 = arith.constant 0 : i32
    %c0_i32_0 = arith.constant 0 : i32
    return %arg0, %c0_i32 : i32, i32
  }
  func.func @transform_1(%arg0: i32) -> (i32, i32) {
    %c0_i32 = arith.constant 0 : i32
    %c0_i32_0 = arith.constant 0 : i32
    return %arg0, %c0_i32 : i32, i32
  }
  func.func @transform_2(%arg0: i32) -> (i32, i32) {
    %c0_i32 = arith.constant 0 : i32
    %c0_i32_0 = arith.constant 0 : i32
    %c0_i32_1 = arith.constant 0 : i32
    return %c0_i32, %c0_i32_0 : i32, i32
  }
  func.func @transform_3(%arg0: i32) -> (i32, i32) {
    %c0_i32 = arith.constant 0 : i32
    %c0_i32_0 = arith.constant 0 : i32
    %c0_i32_1 = arith.constant 0 : i32
    return %c0_i32, %c0_i32_0 : i32, i32
  }
  func.func @transform_4(%arg0: i32) -> (i32, i32) {
    %c0_i32 = arith.constant 0 : i32
    %c0_i32_0 = arith.constant 0 : i32
    %c0_i32_1 = arith.constant 0 : i32
    return %c0_i32, %c0_i32_0 : i32, i32
  }
  func.func @transform_5(%arg0: i32) -> (i32, i32) {
    %c0_i32 = arith.constant 0 : i32
    %c0_i32_0 = arith.constant 0 : i32
    %c0_i32_1 = arith.constant 0 : i32
    return %c0_i32, %c0_i32_0 : i32, i32
  }
  func.func @transform_6(%arg0: i32) -> (i32, i32) {
    %c0_i32 = arith.constant 0 : i32
    %c0_i32_0 = arith.constant 0 : i32
    %c0_i32_1 = arith.constant 0 : i32
    return %c0_i32, %c0_i32_0 : i32, i32
  }
  func.func @transform_7(%arg0: i32) -> (i32, i32) {
    %c0_i32 = arith.constant 0 : i32
    %c0_i32_0 = arith.constant 0 : i32
    %c0_i32_1 = arith.constant 0 : i32
    return %c0_i32, %c0_i32_0 : i32, i32
  }
  func.func @transform_8(%arg0: i32) -> (i32, i32) {
    %c0_i32 = arith.constant 0 : i32
    %c0_i32_0 = arith.constant 0 : i32
    return %arg0, %c0_i32 : i32, i32
  }
}

</mosaic_0001>

<llo_original>
// kernel: tensor_network_forward_batched.1
$region0: #{tensor_network_forward_batched.1}
  #allocation0 [shape = 'u32[]', space=smem, size = 0x4, offset = 0x4, fixed_abs, tag = 'smem constant byte address 0x4 - core index']
  #allocation1 [shape = 'u32[144,128]{1,0:T(1,128)}', space=vmem, size = 0x12000, scoped, tag = 'internal scratch']
  %s0 = inlined_call_operand.vmem [shape: bf16[16,32], index: 0, kind: input, shape index: {}]
  %s1 = inlined_call_operand.vmem [shape: bf16[16,32], index: 1, kind: input, shape index: {}]
  %s2 = inlined_call_operand.vmem [shape: bf16[32,512], index: 2, kind: input, shape index: {}]
  %s3 = inlined_call_operand.vmem [shape: bf16[32,512], index: 3, kind: input, shape index: {}]
  %s4 = inlined_call_operand.vmem [shape: f32[512,16], index: 4, kind: input, shape index: {}]
  %s5 = inlined_call_operand.vmem [shape: bf16[32,16], index: 5, kind: input, shape index: {}]
  %s6 = inlined_call_operand.vmem [shape: bf16[32,16], index: 6, kind: input, shape index: {}]
  %s7 = inlined_call_operand.vmem [shape: f32[1,16], index: 7, kind: input, shape index: {}]
  %s8 = inlined_call_operand.vmem [shape: f32[16,16], index: 8, kind: output, shape index: {}]
  %s9 = sld [smem:[#allocation0]]
  $region42: #{tensor_network_forward_batched.1} parent=0
    _
  %s11 = ssub.s32 1, %s9
  %s12 = scalar_select 0, %s11, %s9
  // Predicated region
  $region2: #{tensor_network_forward_batched.1} parent=0 // pred_check
    _
  $region3: #{tensor_network_forward_batched.1} parent=0 // pred_check_branch
    %14 = sbr.rel (0) target = $region5
  $region4: #{tensor_network_forward_batched.1} parent=0 // pred_region
    _
  $region5: #{tensor_network_forward_batched.1} parent=0 // pred_fallthru
    _
  // Predicated region
  $region6: #{tensor_network_forward_batched.1} parent=0 // pred_check
    _
  $region7: #{tensor_network_forward_batched.1} parent=0 // pred_check_branch
    %16 = sbr.rel (0) target = $region9
  $region8: #{tensor_network_forward_batched.1} parent=0 // pred_region
    _
  $region9: #{tensor_network_forward_batched.1} parent=0 // pred_fallthru
    _
  // Predicated region
  $region10: #{tensor_network_forward_batched.1} parent=0 // pred_check
    _
  $region11: #{tensor_network_forward_batched.1} parent=0 // pred_check_branch
    %18 = sbr.rel (0) target = $region13
  $region12: #{tensor_network_forward_batched.1} parent=0 // pred_region
    _
  $region13: #{tensor_network_forward_batched.1} parent=0 // pred_fallthru
    _
  // Predicated region
  $region14: #{tensor_network_forward_batched.1} parent=0 // pred_check
    _
  $region15: #{tensor_network_forward_batched.1} parent=0 // pred_check_branch
    %20 = sbr.rel (0) target = $region17
  $region16: #{tensor_network_forward_batched.1} parent=0 // pred_region
    _
  $region17: #{tensor_network_forward_batched.1} parent=0 // pred_fallthru
    _
  // Predicated region
  $region18: #{tensor_network_forward_batched.1} parent=0 // pred_check
    _
  $region19: #{tensor_network_forward_batched.1} parent=0 // pred_check_branch
    %22 = sbr.rel (0) target = $region21
  $region20: #{tensor_network_forward_batched.1} parent=0 // pred_region
    _
  $region21: #{tensor_network_forward_batched.1} parent=0 // pred_fallthru
    _
  // Predicated region
  $region22: #{tensor_network_forward_batched.1} parent=0 // pred_check
    _
  $region23: #{tensor_network_forward_batched.1} parent=0 // pred_check_branch
    %24 = sbr.rel (0) target = $region25
  $region24: #{tensor_network_forward_batched.1} parent=0 // pred_region
    _
  $region25: #{tensor_network_forward_batched.1} parent=0 // pred_fallthru
    _
  // Predicated region
  $region26: #{tensor_network_forward_batched.1} parent=0 // pred_check
    _
  $region27: #{tensor_network_forward_batched.1} parent=0 // pred_check_branch
    %26 = sbr.rel (0) target = $region29
  $region28: #{tensor_network_forward_batched.1} parent=0 // pred_region
    _
  $region29: #{tensor_network_forward_batched.1} parent=0 // pred_fallthru
    _
  // Predicated region
  $region30: #{tensor_network_forward_batched.1} parent=0 // pred_check
    _
  $region31: #{tensor_network_forward_batched.1} parent=0 // pred_check_branch
    %28 = sbr.rel (0) target = $region33
  $region32: #{tensor_network_forward_batched.1} parent=0 // pred_region
    _
  $region33: #{tensor_network_forward_batched.1} parent=0 // pred_fallthru
    _
  %v30 = vld [vmem:[%s0] sm:$0xf]
  %v31 = vld [vmem:[%s0 + $0x4] sm:$0xf]
  %v32 = vld [vmem:[%s1] sm:$0xf]
  %v33 = vld [vmem:[%s1 + $0x4] sm:$0xf]
  %v34 = vld [vmem:[%s2] sm:$0xff]
  %v35 = vld [vmem:[%s2 + $0x8] sm:$0xff]
  %v36 = vld [vmem:[%s2 + $0x10] sm:$0xff]
  %v37 = vld [vmem:[%s2 + $0x18] sm:$0xff]
  %v38 = vld [vmem:[%s2 + $0x20] sm:$0xff]
  %v39 = vld [vmem:[%s2 + $0x28] sm:$0xff]
  %v40 = vld [vmem:[%s2 + $0x30] sm:$0xff]
  %v41 = vld [vmem:[%s2 + $0x38] sm:$0xff]
  %v44 = vunpack.c.l.b16 %v30
  %v45 = vunpack.c.l.b16 %v31
  %v46 = vpack.c.b16 %v45, %v44
  %v55 = vunpack.c.l.b16 %v34
  %v56 = vunpack.c.h.b16 %v34
  %v57 = vunpack.c.l.b16 %v35
  %v58 = vunpack.c.h.b16 %v35
  %v59 = vunpack.c.l.b16 %v36
  %v60 = vunpack.c.h.b16 %v36
  %v61 = vunpack.c.l.b16 %v37
  %v62 = vunpack.c.h.b16 %v37
  %v63 = vunpack.c.l.b16 %v38
  %v64 = vunpack.c.h.b16 %v38
  %v65 = vunpack.c.l.b16 %v39
  %v66 = vunpack.c.h.b16 %v39
  %v67 = vunpack.c.l.b16 %v40
  %v68 = vunpack.c.h.b16 %v40
  %v69 = vunpack.c.l.b16 %v41
  %v70 = vunpack.c.h.b16 %v41
  %v71 = vpack.c.b16 %v59, %v55
  %v72 = vpack.c.b16 %v60, %v56
  %v73 = vpack.c.b16 %v61, %v57
  %v74 = vpack.c.b16 %v62, %v58
  %v75 = vpack.c.b16 %v67, %v63
  %v76 = vpack.c.b16 %v68, %v64
  %v77 = vpack.c.b16 %v69, %v65
  %v78 = vpack.c.b16 %v70, %v66
  %vm87 = vcmask 261120
  %v89 = vsel %vm87, %v46, 0
  %91 = vmatprep.subr.bf16.mxu0 %v72
  %92 = vmatpush1.bf16.msra.mxu0 %v71
  %93 = vmatprep.subr.bf16.mxu0 %v76
  %94 = vmatpush1.bf16.msra.mxu0 %v75
  %95 = vmatprep.subr.bf16.mxu0 0
  %96 = vmatpush1.bf16.msra.mxu0 0
  %97 = vmatprep.subr.bf16.mxu0 0
  %98 = vmatpush1.bf16.msra.mxu0 0
  %99 = vmatprep.subr.bf16.mxu0 0
  %100 = vmatpush1.bf16.msra.mxu0 0
  %101 = vmatprep.subr.bf16.mxu0 0
  %102 = vmatpush1.bf16.msra.mxu0 0
  %103 = vmatprep.subr.bf16.mxu0 0
  %104 = vmatpush1.bf16.msra.mxu0 0
  %105 = vmatprep.subr.bf16.mxu0 0
  %106 = vmatpush1.bf16.msra.mxu0 0
  %107 = vmatprep.subr.bf16.mxu0 0
  %108 = vmatpush1.bf16.msra.mxu0 0
  %109 = vmatprep.subr.bf16.mxu0 0
  %110 = vmatpush1.bf16.msra.mxu0 0
  %111 = vmatprep.subr.bf16.mxu0 0
  %112 = vmatpush1.bf16.msra.mxu0 0
  %113 = vmatprep.subr.bf16.mxu0 0
  %114 = vmatpush1.bf16.msra.mxu0 0
  %115 = vmatprep.subr.bf16.mxu0 0
  %116 = vmatpush1.bf16.msra.mxu0 0
  %117 = vmatprep.subr.bf16.mxu0 0
  %118 = vmatpush1.bf16.msra.mxu0 0
  %119 = vmatprep.subr.bf16.mxu0 0
  %120 = vmatpush1.bf16.msra.mxu0 0
  %121 = vmatprep.subr.bf16.mxu0 0
  %122 = vmatpush1.bf16.msra.mxu0 0
  %123 = vmatprep.mubr.bf16.mxu0 0
  %124 = vmatmul.mubr.bf16.gmra.mrb[0].mxu0 %v89
  %v125 = vpop.f32.mrb[0].mxu0
  %v126 = vadd.f32 0.0, %v125
  %v127 = vpop.f32.mrb[0].mxu0
  %v128 = vadd.f32 0.0, %v127
  %v129 = vpop.f32.mrb[0].mxu0
  %v130 = vadd.f32 0.0, %v129
  %v131 = vpop.f32.mrb[0].mxu0
  %v132 = vadd.f32 0.0, %v131
  %133 = vdwg.mxu0
  %134 = vmatprep.subr.bf16.mxu0 %v74
  %135 = vmatpush1.bf16.msra.mxu0 %v73
  %136 = vmatprep.subr.bf16.mxu0 %v78
  %137 = vmatpush1.bf16.msra.mxu0 %v77
  %138 = vmatprep.subr.bf16.mxu0 0
  %139 = vmatpush1.bf16.msra.mxu0 0
  %140 = vmatprep.subr.bf16.mxu0 0
  %141 = vmatpush1.bf16.msra.mxu0 0
  %142 = vmatprep.subr.bf16.mxu0 0
  %143 = vmatpush1.bf16.msra.mxu0 0
  %144 = vmatprep.subr.bf16.mxu0 0
  %145 = vmatpush1.bf16.msra.mxu0 0
  %146 = vmatprep.subr.bf16.mxu0 0
  %147 = vmatpush1.bf16.msra.mxu0 0
  %148 = vmatprep.subr.bf16.mxu0 0
  %149 = vmatpush1.bf16.msra.mxu0 0
  %150 = vmatprep.subr.bf16.mxu0 0
  %151 = vmatpush1.bf16.msra.mxu0 0
  %152 = vmatprep.subr.bf16.mxu0 0
  %153 = vmatpush1.bf16.msra.mxu0 0
  %154 = vmatprep.subr.bf16.mxu0 0
  %155 = vmatpush1.bf16.msra.mxu0 0
  %156 = vmatprep.subr.bf16.mxu0 0
  %157 = vmatpush1.bf16.msra.mxu0 0
  %158 = vmatprep.subr.bf16.mxu0 0
  %159 = vmatpush1.bf16.msra.mxu0 0
  %160 = vmatprep.subr.bf16.mxu0 0
  %161 = vmatpush1.bf16.msra.mxu0 0
  %162 = vmatprep.subr.bf16.mxu0 0
  %163 = vmatpush1.bf16.msra.mxu0 0
  %164 = vmatprep.subr.bf16.mxu0 0
  %165 = vmatpush1.bf16.msra.mxu0 0
  %166 = vmatprep.mubr.bf16.mxu0 0
  %167 = vmatmul.mubr.bf16.gmra.mrb[0].mxu0 %v89
  %v168 = vpop.f32.mrb[0].mxu0
  %v169 = vadd.f32 0.0, %v168
  %v170 = vpop.f32.mrb[0].mxu0
  %v171 = vadd.f32 0.0, %v170
  %v172 = vpop.f32.mrb[0].mxu0
  %v173 = vadd.f32 0.0, %v172
  %v174 = vpop.f32.mrb[0].mxu0
  %v175 = vadd.f32 0.0, %v174
  %176 = vdwg.mxu0
  %v177 = vld [vmem:[%s3] sm:$0xff]
  %v178 = vld [vmem:[%s3 + $0x8] sm:$0xff]
  %v179 = vld [vmem:[%s3 + $0x10] sm:$0xff]
  %v180 = vld [vmem:[%s3 + $0x18] sm:$0xff]
  %v181 = vld [vmem:[%s3 + $0x20] sm:$0xff]
  %v182 = vld [vmem:[%s3 + $0x28] sm:$0xff]
  %v183 = vld [vmem:[%s3 + $0x30] sm:$0xff]
  %v184 = vld [vmem:[%s3 + $0x38] sm:$0xff]
  %v187 = vunpack.c.l.b16 %v32
  %v188 = vunpack.c.l.b16 %v33
  %v189 = vpack.c.b16 %v188, %v187
  %v198 = vunpack.c.l.b16 %v177
  %v199 = vunpack.c.h.b16 %v177
  %v200 = vunpack.c.l.b16 %v178
  %v201 = vunpack.c.h.b16 %v178
  %v202 = vunpack.c.l.b16 %v179
  %v203 = vunpack.c.h.b16 %v179
  %v204 = vunpack.c.l.b16 %v180
  %v205 = vunpack.c.h.b16 %v180
  %v206 = vunpack.c.l.b16 %v181
  %v207 = vunpack.c.h.b16 %v181
  %v208 = vunpack.c.l.b16 %v182
  %v209 = vunpack.c.h.b16 %v182
  %v210 = vunpack.c.l.b16 %v183
  %v211 = vunpack.c.h.b16 %v183
  %v212 = vunpack.c.l.b16 %v184
  %v213 = vunpack.c.h.b16 %v184
  %v214 = vpack.c.b16 %v202, %v198
  %v215 = vpack.c.b16 %v203, %v199
  %v216 = vpack.c.b16 %v204, %v200
  %v217 = vpack.c.b16 %v205, %v201
  %v218 = vpack.c.b16 %v210, %v206
  %v219 = vpack.c.b16 %v211, %v207
  %v220 = vpack.c.b16 %v212, %v208
  %v221 = vpack.c.b16 %v213, %v209
  %v231 = vsel %vm87, %v189, 0
  %233 = vmatprep.subr.bf16.mxu0 %v215
  %234 = vmatpush1.bf16.msra.mxu0 %v214
  %235 = vmatprep.subr.bf16.mxu0 %v219
  %236 = vmatpush1.bf16.msra.mxu0 %v218
  %237 = vmatprep.subr.bf16.mxu0 0
  %238 = vmatpush1.bf16.msra.mxu0 0
  %239 = vmatprep.subr.bf16.mxu0 0
  %240 = vmatpush1.bf16.msra.mxu0 0
  %241 = vmatprep.subr.bf16.mxu0 0
  %242 = vmatpush1.bf16.msra.mxu0 0
  %243 = vmatprep.subr.bf16.mxu0 0
  %244 = vmatpush1.bf16.msra.mxu0 0
  %245 = vmatprep.subr.bf16.mxu0 0
  %246 = vmatpush1.bf16.msra.mxu0 0
  %247 = vmatprep.subr.bf16.mxu0 0
  %248 = vmatpush1.bf16.msra.mxu0 0
  %249 = vmatprep.subr.bf16.mxu0 0
  %250 = vmatpush1.bf16.msra.mxu0 0
  %251 = vmatprep.subr.bf16.mxu0 0
  %252 = vmatpush1.bf16.msra.mxu0 0
  %253 = vmatprep.subr.bf16.mxu0 0
  %254 = vmatpush1.bf16.msra.mxu0 0
  %255 = vmatprep.subr.bf16.mxu0 0
  %256 = vmatpush1.bf16.msra.mxu0 0
  %257 = vmatprep.subr.bf16.mxu0 0
  %258 = vmatpush1.bf16.msra.mxu0 0
  %259 = vmatprep.subr.bf16.mxu0 0
  %260 = vmatpush1.bf16.msra.mxu0 0
  %261 = vmatprep.subr.bf16.mxu0 0
  %262 = vmatpush1.bf16.msra.mxu0 0
  %263 = vmatprep.subr.bf16.mxu0 0
  %264 = vmatpush1.bf16.msra.mxu0 0
  %265 = vmatprep.mubr.bf16.mxu0 0
  %266 = vmatmul.mubr.bf16.gmra.mrb[0].mxu0 %v231
  %v267 = vpop.f32.mrb[0].mxu0
  %v268 = vadd.f32 0.0, %v267
  %v269 = vpop.f32.mrb[0].mxu0
  %v270 = vadd.f32 0.0, %v269
  %v271 = vpop.f32.mrb[0].mxu0
  %v272 = vadd.f32 0.0, %v271
  %v273 = vpop.f32.mrb[0].mxu0
  %v274 = vadd.f32 0.0, %v273
  %275 = vdwg.mxu0
  %276 = vmatprep.subr.bf16.mxu0 %v217
  %277 = vmatpush1.bf16.msra.mxu0 %v216
  %278 = vmatprep.subr.bf16.mxu0 %v221
  %279 = vmatpush1.bf16.msra.mxu0 %v220
  %280 = vmatprep.subr.bf16.mxu0 0
  %281 = vmatpush1.bf16.msra.mxu0 0
  %282 = vmatprep.subr.bf16.mxu0 0
  %283 = vmatpush1.bf16.msra.mxu0 0
  %284 = vmatprep.subr.bf16.mxu0 0
  %285 = vmatpush1.bf16.msra.mxu0 0
  %286 = vmatprep.subr.bf16.mxu0 0
  %287 = vmatpush1.bf16.msra.mxu0 0
  %288 = vmatprep.subr.bf16.mxu0 0
  %289 = vmatpush1.bf16.msra.mxu0 0
  %290 = vmatprep.subr.bf16.mxu0 0
  %291 = vmatpush1.bf16.msra.mxu0 0
  %292 = vmatprep.subr.bf16.mxu0 0
  %293 = vmatpush1.bf16.msra.mxu0 0
  %294 = vmatprep.subr.bf16.mxu0 0
  %295 = vmatpush1.bf16.msra.mxu0 0
  %296 = vmatprep.subr.bf16.mxu0 0
  %297 = vmatpush1.bf16.msra.mxu0 0
  %298 = vmatprep.subr.bf16.mxu0 0
  %299 = vmatpush1.bf16.msra.mxu0 0
  %300 = vmatprep.subr.bf16.mxu0 0
  %301 = vmatpush1.bf16.msra.mxu0 0
  %302 = vmatprep.subr.bf16.mxu0 0
  %303 = vmatpush1.bf16.msra.mxu0 0
  %304 = vmatprep.subr.bf16.mxu0 0
  %305 = vmatpush1.bf16.msra.mxu0 0
  %306 = vmatprep.subr.bf16.mxu0 0
  %307 = vmatpush1.bf16.msra.mxu0 0
  %308 = vmatprep.mubr.bf16.mxu0 0
  %309 = vmatmul.mubr.bf16.gmra.mrb[0].mxu0 %v231
  %v310 = vpop.f32.mrb[0].mxu0
  %v311 = vadd.f32 0.0, %v310
  %v312 = vpop.f32.mrb[0].mxu0
  %v313 = vadd.f32 0.0, %v312
  %v314 = vpop.f32.mrb[0].mxu0
  %v315 = vadd.f32 0.0, %v314
  %v316 = vpop.f32.mrb[0].mxu0
  %v317 = vadd.f32 0.0, %v316
  %318 = vdwg.mxu0
  %v319 = vmul.f32 %v126, %v268
  %v320 = vmul.f32 %v128, %v270
  %v321 = vmul.f32 %v169, %v311
  %v322 = vmul.f32 %v171, %v313
  %v323 = vmul.f32 %v130, %v272
  %v324 = vmul.f32 %v132, %v274
  %v325 = vmul.f32 %v173, %v315
  %v326 = vmul.f32 %v175, %v317
  %v327 = vld [vmem:[%s4] sm:$0xff]
  %v328 = vld [vmem:[%s4 + $0x8] sm:$0xff]
  %v329 = vld [vmem:[%s4 + $0x10] sm:$0xff]
  %v330 = vld [vmem:[%s4 + $0x18] sm:$0xff]
  %v331 = vld [vmem:[%s4 + $0x20] sm:$0xff]
  %v332 = vld [vmem:[%s4 + $0x28] sm:$0xff]
  %v333 = vld [vmem:[%s4 + $0x30] sm:$0xff]
  %v334 = vld [vmem:[%s4 + $0x38] sm:$0xff]
  %v335 = vld [vmem:[%s4 + $0x40] sm:$0xff]
  %v336 = vld [vmem:[%s4 + $0x48] sm:$0xff]
  %v337 = vld [vmem:[%s4 + $0x50] sm:$0xff]
  %v338 = vld [vmem:[%s4 + $0x58] sm:$0xff]
  %v339 = vld [vmem:[%s4 + $0x60] sm:$0xff]
  %v340 = vld [vmem:[%s4 + $0x68] sm:$0xff]
  %v341 = vld [vmem:[%s4 + $0x70] sm:$0xff]
  %v342 = vld [vmem:[%s4 + $0x78] sm:$0xff]
  %v343 = vld [vmem:[%s4 + $0x80] sm:$0xff]
  %v344 = vld [vmem:[%s4 + $0x88] sm:$0xff]
  %v345 = vld [vmem:[%s4 + $0x90] sm:$0xff]
  %v346 = vld [vmem:[%s4 + $0x98] sm:$0xff]
  %v347 = vld [vmem:[%s4 + $0xa0] sm:$0xff]
  %v348 = vld [vmem:[%s4 + $0xa8] sm:$0xff]
  %v349 = vld [vmem:[%s4 + $0xb0] sm:$0xff]
  %v350 = vld [vmem:[%s4 + $0xb8] sm:$0xff]
  %v351 = vld [vmem:[%s4 + $0xc0] sm:$0xff]
  %v352 = vld [vmem:[%s4 + $0xc8] sm:$0xff]
  %v353 = vld [vmem:[%s4 + $0xd0] sm:$0xff]
  %v354 = vld [vmem:[%s4 + $0xd8] sm:$0xff]
  %v355 = vld [vmem:[%s4 + $0xe0] sm:$0xff]
  %v356 = vld [vmem:[%s4 + $0xe8] sm:$0xff]
  %v357 = vld [vmem:[%s4 + $0xf0] sm:$0xff]
  %v358 = vld [vmem:[%s4 + $0xf8] sm:$0xff]
  %v359 = vld [vmem:[%s4 + $0x100] sm:$0xff]
  %v360 = vld [vmem:[%s4 + $0x108] sm:$0xff]
  %v361 = vld [vmem:[%s4 + $0x110] sm:$0xff]
  %v362 = vld [vmem:[%s4 + $0x118] sm:$0xff]
  %v363 = vld [vmem:[%s4 + $0x120] sm:$0xff]
  %v364 = vld [vmem:[%s4 + $0x128] sm:$0xff]
  %v365 = vld [vmem:[%s4 + $0x130] sm:$0xff]
  %v366 = vld [vmem:[%s4 + $0x138] sm:$0xff]
  %v367 = vld [vmem:[%s4 + $0x140] sm:$0xff]
  %v368 = vld [vmem:[%s4 + $0x148] sm:$0xff]
  %v369 = vld [vmem:[%s4 + $0x150] sm:$0xff]
  %v370 = vld [vmem:[%s4 + $0x158] sm:$0xff]
  %v371 = vld [vmem:[%s4 + $0x160] sm:$0xff]
  %v372 = vld [vmem:[%s4 + $0x168] sm:$0xff]
  %v373 = vld [vmem:[%s4 + $0x170] sm:$0xff]
  %v374 = vld [vmem:[%s4 + $0x178] sm:$0xff]
  %v375 = vld [vmem:[%s4 + $0x180] sm:$0xff]
  %v376 = vld [vmem:[%s4 + $0x188] sm:$0xff]
  %v377 = vld [vmem:[%s4 + $0x190] sm:$0xff]
  %v378 = vld [vmem:[%s4 + $0x198] sm:$0xff]
  %v379 = vld [vmem:[%s4 + $0x1a0] sm:$0xff]
  %v380 = vld [vmem:[%s4 + $0x1a8] sm:$0xff]
  %v381 = vld [vmem:[%s4 + $0x1b0] sm:$0xff]
  %v382 = vld [vmem:[%s4 + $0x1b8] sm:$0xff]
  %v383 = vld [vmem:[%s4 + $0x1c0] sm:$0xff]
  %v384 = vld [vmem:[%s4 + $0x1c8] sm:$0xff]
  %v385 = vld [vmem:[%s4 + $0x1d0] sm:$0xff]
  %v386 = vld [vmem:[%s4 + $0x1d8] sm:$0xff]
  %v387 = vld [vmem:[%s4 + $0x1e0] sm:$0xff]
  %v388 = vld [vmem:[%s4 + $0x1e8] sm:$0xff]
  %v389 = vld [vmem:[%s4 + $0x1f0] sm:$0xff]
  %v390 = vld [vmem:[%s4 + $0x1f8] sm:$0xff]
  %v391 = vld [vmem:[%s5] sm:$0xf]
  %v392 = vld [vmem:[%s5 + $0x4] sm:$0xf]
  %v393 = vld [vmem:[%s5 + $0x8] sm:$0xf]
  %v394 = vld [vmem:[%s5 + $0xc] sm:$0xf]
  %v395 = vld [vmem:[%s6] sm:$0xf]
  %v396 = vld [vmem:[%s6 + $0x4] sm:$0xf]
  %v397 = vld [vmem:[%s6 + $0x8] sm:$0xf]
  %v398 = vld [vmem:[%s6 + $0xc] sm:$0xf]
  %v403 = vunpack.c.l.b16 %v395
  %v404 = vunpack.c.l.b16 %v396
  %v405 = vunpack.c.l.b16 %v397
  %v406 = vunpack.c.l.b16 %v398
  %v407 = vpack.c.b16 %v404, %v403
  %v408 = vpack.c.b16 %v406, %v405
  %411 = vmatprep.subr.bf16.mxu0 0
  %412 = vmatpush1.bf16.msra.mxu0 %v407
  %413 = vmatprep.subr.bf16.mxu0 0
  %414 = vmatpush1.bf16.msra.mxu0 %v408
  %415 = vmatprep.subr.bf16.mxu0 0
  %416 = vmatpush1.bf16.msra.mxu0 0
  %417 = vmatprep.subr.bf16.mxu0 0
  %418 = vmatpush1.bf16.msra.mxu0 0
  %419 = vmatprep.subr.bf16.mxu0 0
  %420 = vmatpush1.bf16.msra.mxu0 0
  %421 = vmatprep.subr.bf16.mxu0 0
  %422 = vmatpush1.bf16.msra.mxu0 0
  %423 = vmatprep.subr.bf16.mxu0 0
  %424 = vmatpush1.bf16.msra.mxu0 0
  %425 = vmatprep.subr.bf16.mxu0 0
  %426 = vmatpush1.bf16.msra.mxu0 0
  %427 = vmatprep.subr.bf16.mxu0 0
  %428 = vmatpush1.bf16.msra.mxu0 0
  %429 = vmatprep.subr.bf16.mxu0 0
  %430 = vmatpush1.bf16.msra.mxu0 0
  %431 = vmatprep.subr.bf16.mxu0 0
  %432 = vmatpush1.bf16.msra.mxu0 0
  %433 = vmatprep.subr.bf16.mxu0 0
  %434 = vmatpush1.bf16.msra.mxu0 0
  %435 = vmatprep.subr.bf16.mxu0 0
  %436 = vmatpush1.bf16.msra.mxu0 0
  %437 = vmatprep.subr.bf16.mxu0 0
  %438 = vmatpush1.bf16.msra.mxu0 0
  %439 = vmatprep.subr.bf16.mxu0 0
  %440 = vmatpush1.bf16.msra.mxu0 0
  %441 = vmatprep.subr.bf16.mxu0 0
  %442 = vmatpush1.bf16.msra.mxu0 0
  %443 = vmatprep.mubr.bf16.mxu0 0
  %444 = vmatmul.mubr.bf16.gmra.mrb[0].mxu0 %v231
  %v445 = vpop.f32.mrb[0].mxu0
  %v446 = vadd.f32 0.0, %v445
  %v447 = vpop.f32.mrb[0].mxu0
  %v448 = vpop.f32.mrb[0].mxu0
  %v449 = vadd.f32 0.0, %v448
  %v450 = vpop.f32.mrb[0].mxu0
  %451 = vdwg.mxu0
  %v456 = vunpack.c.l.b16 %v391
  %v457 = vunpack.c.l.b16 %v392
  %v458 = vunpack.c.l.b16 %v393
  %v459 = vunpack.c.l.b16 %v394
  %v460 = vpack.c.b16 %v457, %v456
  %v461 = vpack.c.b16 %v459, %v458
  %464 = vmatprep.subr.bf16.mxu0 0
  %465 = vmatpush1.bf16.msra.mxu0 %v460
  %466 = vmatprep.subr.bf16.mxu0 0
  %467 = vmatpush1.bf16.msra.mxu0 %v461
  %468 = vmatprep.subr.bf16.mxu0 0
  %469 = vmatpush1.bf16.msra.mxu0 0
  %470 = vmatprep.subr.bf16.mxu0 0
  %471 = vmatpush1.bf16.msra.mxu0 0
  %472 = vmatprep.subr.bf16.mxu0 0
  %473 = vmatpush1.bf16.msra.mxu0 0
  %474 = vmatprep.subr.bf16.mxu0 0
  %475 = vmatpush1.bf16.msra.mxu0 0
  %476 = vmatprep.subr.bf16.mxu0 0
  %477 = vmatpush1.bf16.msra.mxu0 0
  %478 = vmatprep.subr.bf16.mxu0 0
  %479 = vmatpush1.bf16.msra.mxu0 0
  %480 = vmatprep.subr.bf16.mxu0 0
  %481 = vmatpush1.bf16.msra.mxu0 0
  %482 = vmatprep.subr.bf16.mxu0 0
  %483 = vmatpush1.bf16.msra.mxu0 0
  %484 = vmatprep.subr.bf16.mxu0 0
  %485 = vmatpush1.bf16.msra.mxu0 0
  %486 = vmatprep.subr.bf16.mxu0 0
  %487 = vmatpush1.bf16.msra.mxu0 0
  %488 = vmatprep.subr.bf16.mxu0 0
  %489 = vmatpush1.bf16.msra.mxu0 0
  %490 = vmatprep.subr.bf16.mxu0 0
  %491 = vmatpush1.bf16.msra.mxu0 0
  %492 = vmatprep.subr.bf16.mxu0 0
  %493 = vmatpush1.bf16.msra.mxu0 0
  %494 = vmatprep.subr.bf16.mxu0 0
  %495 = vmatpush1.bf16.msra.mxu0 0
  %496 = vmatprep.mubr.bf16.mxu0 0
  %497 = vmatmul.mubr.bf16.gmra.mrb[0].mxu0 %v89
  %v498 = vpop.f32.mrb[0].mxu0
  %v499 = vadd.f32 %v446, %v498
  %v500 = vpop.f32.mrb[0].mxu0
  %v501 = vpop.f32.mrb[0].mxu0
  %v502 = vadd.f32 %v449, %v501
  %v503 = vpop.f32.mrb[0].mxu0
  %504 = vdwg.mxu0
  %505 = vmatprep.subr.mxu0 0.0
  %506 = vmatpush1.msra.mxu0 %v327
  %507 = vmatprep.subr.mxu0 0.0
  %508 = vmatpush1.msra.mxu0 %v328
  %509 = vmatprep.subr.mxu0 0.0
  %510 = vmatpush1.msra.mxu0 %v329
  %511 = vmatprep.subr.mxu0 0.0
  %512 = vmatpush1.msra.mxu0 %v330
  %513 = vmatprep.subr.mxu0 0.0
  %514 = vmatpush1.msra.mxu0 %v331
  %515 = vmatprep.subr.mxu0 0.0
  %516 = vmatpush1.msra.mxu0 %v332
  %517 = vmatprep.subr.mxu0 0.0
  %518 = vmatpush1.msra.mxu0 %v333
  %519 = vmatprep.subr.mxu0 0.0
  %520 = vmatpush1.msra.mxu0 %v334
  %521 = vmatprep.subr.mxu0 0.0
  %522 = vmatpush1.msra.mxu0 %v335
  %523 = vmatprep.subr.mxu0 0.0
  %524 = vmatpush1.msra.mxu0 %v336
  %525 = vmatprep.subr.mxu0 0.0
  %526 = vmatpush1.msra.mxu0 %v337
  %527 = vmatprep.subr.mxu0 0.0
  %528 = vmatpush1.msra.mxu0 %v338
  %529 = vmatprep.subr.mxu0 0.0
  %530 = vmatpush1.msra.mxu0 %v339
  %531 = vmatprep.subr.mxu0 0.0
  %532 = vmatpush1.msra.mxu0 %v340
  %533 = vmatprep.subr.mxu0 0.0
  %534 = vmatpush1.msra.mxu0 %v341
  %535 = vmatprep.subr.mxu0 0.0
  %536 = vmatpush1.msra.mxu0 %v342
  %537 = vmatprep.subr.mxu0 0.0
  %538 = vmatpush1.msra.mxu0 %v343
  %539 = vmatprep.subr.mxu0 0.0
  %540 = vmatpush1.msra.mxu0 %v344
  %541 = vmatprep.subr.mxu0 0.0
  %542 = vmatpush1.msra.mxu0 %v345
  %543 = vmatprep.subr.mxu0 0.0
  %544 = vmatpush1.msra.mxu0 %v346
  %545 = vmatprep.subr.mxu0 0.0
  %546 = vmatpush1.msra.mxu0 %v347
  %547 = vmatprep.subr.mxu0 0.0
  %548 = vmatpush1.msra.mxu0 %v348
  %549 = vmatprep.subr.mxu0 0.0
  %550 = vmatpush1.msra.mxu0 %v349
  %551 = vmatprep.subr.mxu0 0.0
  %552 = vmatpush1.msra.mxu0 %v350
  %553 = vmatprep.subr.mxu0 0.0
  %554 = vmatpush1.msra.mxu0 %v351
  %555 = vmatprep.subr.mxu0 0.0
  %556 = vmatpush1.msra.mxu0 %v352
  %557 = vmatprep.subr.mxu0 0.0
  %558 = vmatpush1.msra.mxu0 %v353
  %559 = vmatprep.subr.mxu0 0.0
  %560 = vmatpush1.msra.mxu0 %v354
  %561 = vmatprep.subr.mxu0 0.0
  %562 = vmatpush1.msra.mxu0 %v355
  %563 = vmatprep.subr.mxu0 0.0
  %564 = vmatpush1.msra.mxu0 %v356
  %565 = vmatprep.subr.mxu0 0.0
  %566 = vmatpush1.msra.mxu0 %v357
  %567 = vmatprep.subr.mxu0 0.0
  %568 = vmatpush1.msra.mxu0 %v358
  %569 = vmatprep.mubr.f32.mxu0 %v320
  %570 = vmatmul.mubr.f32.gmra.mrb[0].mxu0 %v319
  %v571 = vpop.f32.mrb[0].mxu0
  %v572 = vadd.f32 %v499, %v571
  %v573 = vpop.f32.mrb[0].mxu0
  %574 = vmatprep.mubr.f32.mxu0 %v324
  %575 = vmatmul.mubr.f32.gmra.mrb[0].mxu0 %v323
  %v576 = vpop.f32.mrb[0].mxu0
  %v577 = vadd.f32 %v502, %v576
  %v578 = vpop.f32.mrb[0].mxu0
  %579 = vdwg.mxu0
  %580 = vmatprep.subr.mxu0 0.0
  %581 = vmatpush1.msra.mxu0 %v359
  %582 = vmatprep.subr.mxu0 0.0
  %583 = vmatpush1.msra.mxu0 %v360
  %584 = vmatprep.subr.mxu0 0.0
  %585 = vmatpush1.msra.mxu0 %v361
  %586 = vmatprep.subr.mxu0 0.0
  %587 = vmatpush1.msra.mxu0 %v362
  %588 = vmatprep.subr.mxu0 0.0
  %589 = vmatpush1.msra.mxu0 %v363
  %590 = vmatprep.subr.mxu0 0.0
  %591 = vmatpush1.msra.mxu0 %v364
  %592 = vmatprep.subr.mxu0 0.0
  %593 = vmatpush1.msra.mxu0 %v365
  %594 = vmatprep.subr.mxu0 0.0
  %595 = vmatpush1.msra.mxu0 %v366
  %596 = vmatprep.subr.mxu0 0.0
  %597 = vmatpush1.msra.mxu0 %v367
  %598 = vmatprep.subr.mxu0 0.0
  %599 = vmatpush1.msra.mxu0 %v368
  %600 = vmatprep.subr.mxu0 0.0
  %601 = vmatpush1.msra.mxu0 %v369
  %602 = vmatprep.subr.mxu0 0.0
  %603 = vmatpush1.msra.mxu0 %v370
  %604 = vmatprep.subr.mxu0 0.0
  %605 = vmatpush1.msra.mxu0 %v371
  %606 = vmatprep.subr.mxu0 0.0
  %607 = vmatpush1.msra.mxu0 %v372
  %608 = vmatprep.subr.mxu0 0.0
  %609 = vmatpush1.msra.mxu0 %v373
  %610 = vmatprep.subr.mxu0 0.0
  %611 = vmatpush1.msra.mxu0 %v374
  %612 = vmatprep.subr.mxu0 0.0
  %613 = vmatpush1.msra.mxu0 %v375
  %614 = vmatprep.subr.mxu0 0.0
  %615 = vmatpush1.msra.mxu0 %v376
  %616 = vmatprep.subr.mxu0 0.0
  %617 = vmatpush1.msra.mxu0 %v377
  %618 = vmatprep.subr.mxu0 0.0
  %619 = vmatpush1.msra.mxu0 %v378
  %620 = vmatprep.subr.mxu0 0.0
  %621 = vmatpush1.msra.mxu0 %v379
  %622 = vmatprep.subr.mxu0 0.0
  %623 = vmatpush1.msra.mxu0 %v380
  %624 = vmatprep.subr.mxu0 0.0
  %625 = vmatpush1.msra.mxu0 %v381
  %626 = vmatprep.subr.mxu0 0.0
  %627 = vmatpush1.msra.mxu0 %v382
  %628 = vmatprep.subr.mxu0 0.0
  %629 = vmatpush1.msra.mxu0 %v383
  %630 = vmatprep.subr.mxu0 0.0
  %631 = vmatpush1.msra.mxu0 %v384
  %632 = vmatprep.subr.mxu0 0.0
  %633 = vmatpush1.msra.mxu0 %v385
  %634 = vmatprep.subr.mxu0 0.0
  %635 = vmatpush1.msra.mxu0 %v386
  %636 = vmatprep.subr.mxu0 0.0
  %637 = vmatpush1.msra.mxu0 %v387
  %638 = vmatprep.subr.mxu0 0.0
  %639 = vmatpush1.msra.mxu0 %v388
  %640 = vmatprep.subr.mxu0 0.0
  %641 = vmatpush1.msra.mxu0 %v389
  %642 = vmatprep.subr.mxu0 0.0
  %643 = vmatpush1.msra.mxu0 %v390
  %644 = vmatprep.mubr.f32.mxu0 %v322
  %645 = vmatmul.mubr.f32.gmra.mrb[0].mxu0 %v321
  %v646 = vpop.f32.mrb[0].mxu0
  %v647 = vadd.f32 %v572, %v646
  %v648 = vpop.f32.mrb[0].mxu0
  %649 = vmatprep.mubr.f32.mxu0 %v326
  %650 = vmatmul.mubr.f32.gmra.mrb[0].mxu0 %v325
  %v651 = vpop.f32.mrb[0].mxu0
  %v652 = vadd.f32 %v577, %v651
  %v653 = vpop.f32.mrb[0].mxu0
  %654 = vdwg.mxu0
  %v655 = vld [vmem:[%s7] sm:$0x1]
  %v657 = vlaneseq
  %v658 = vshrl.u32 %v657, 7
  %v659 = vsub.s32 0, %v658
  %v660 = vrot.slane %v655, %v659
  %v662 = vadd.f32 %v647, %v660
  %v663 = vadd.f32 %v652, %v660
  %v664 = vmax.f32 %v662, 0.0
  %v665 = vmax.f32 %v663, 0.0
  %vm666 = vcmask 130048
  %667 = vst.msk [vmem:[%s8] sm:$0xff] %vm666, %v664
  %668 = vst.msk [vmem:[%s8 + $0x8] sm:$0xff] %vm666, %v665
  // Predicated region
  $region34: #{tensor_network_forward_batched.1} parent=0 // pred_check
    _
  $region35: #{tensor_network_forward_batched.1} parent=0 // pred_check_branch
    %670 = sbr.rel (0) target = $region37
  $region36: #{tensor_network_forward_batched.1} parent=0 // pred_region
    _
  $region37: #{tensor_network_forward_batched.1} parent=0 // pred_fallthru
    _
  // Predicated region
  $region38: #{tensor_network_forward_batched.1} parent=0 // pred_check
    _
  $region39: #{tensor_network_forward_batched.1} parent=0 // pred_check_branch
    %672 = sbr.rel (0) target = $region41
  $region40: #{tensor_network_forward_batched.1} parent=0 // pred_region
    _
  $region41: #{tensor_network_forward_batched.1} parent=0 // pred_fallthru
    _

</llo_original>
